<compile_context>
chip_gen: v6e
topology: v6e:2x2x1
jax: 0.10.0
libtpu: 0.0.40
codegen_flags: <defaults>
</compile_context>

<pallas_src>
import functools
import math

import jax
import jax.numpy as jnp
from jax.experimental import pallas as pl
from jax.experimental.pallas import tpu as pltpu


_LANE = 128
_VMEM_LIMIT_BYTES = 32 * 1024 * 1024   # fits v7x's 64 MiB physical with headroom
_Y_RESIDENT_BYTES = 8 * 1024 * 1024    # keep Y fully VMEM-resident below this


def _round_up(x, m):
    return ((x + m - 1) // m) * m


def _compiler_params(sem):
    return pltpu.CompilerParams(
        dimension_semantics=sem, vmem_limit_bytes=_VMEM_LIMIT_BYTES)


def _choose_tiles(n, block_m, block_k):
    """Clamp tiles to the lane-padded problem size (no lcm over-padding for
    small graphs) and keep >= 2 row tiles when possible for v7x megacore."""
    n_128 = _round_up(max(n, 1), _LANE)
    bm = min(block_m, n_128)
    bk = min(block_k, n_128)
    tile = (bm * bk) // math.gcd(bm, bk)
    n_p = _round_up(max(n, 1), tile)
    if n_p // bm < 2 and n_p >= 2 * _LANE:
        bm = n_p // 2          # multiple of 64 >= 128 -> valid sublane tile
    return n_p, bm, bk


# ----------------------------- Pallas kernels ------------------------------ #

def _degree_norms_kernel(a_ref, in_ref, out_ref, col_acc_ref, row_acc_ref, *,
                         block_m):
    """ONE pass over A producing both rsqrt(max(deg,1)) norm vectors.

    Grid = (col_tiles, row_tiles), row axis innermost:
      * column sums accumulate in a (1, bk) scratch across row tiles and are
        finalized into the current out_norm column block,
      * row sums accumulate into a persistent (n_p, 1) scratch over the whole
        grid and are finalized into the resident in_norm output at the end.
    """
    k = pl.program_id(0)
    i = pl.program_id(1)

    @pl.when((k == 0) & (i == 0))
    def _():
        row_acc_ref[...] = jnp.zeros_like(row_acc_ref)

    @pl.when(i == 0)
    def _():
        col_acc_ref[...] = jnp.zeros_like(col_acc_ref)

    a = a_ref[...].astype(jnp.float32)           # int8 0/1 -> f32 (VPU)
    col_acc_ref[...] += jnp.sum(a, axis=0, keepdims=True)
    r0 = pl.multiple_of(i * block_m, block_m)
    row_acc_ref[pl.ds(r0, block_m), :] += jnp.sum(a, axis=1, keepdims=True)

    @pl.when(i == pl.num_programs(1) - 1)
    def _():
        out_ref[...] = jax.lax.rsqrt(jnp.maximum(col_acc_ref[...], 1.0))

    @pl.when((k == pl.num_programs(0) - 1) & (i == pl.num_programs(1) - 1))
    def _():
        in_ref[...] = jax.lax.rsqrt(jnp.maximum(row_acc_ref[...], 1.0))


def _xw_scale_kernel(x_ref, w_ref, out_norm_ref, y_ref):
    """Y = out_norm * (X @ W); bf16 operands, f32 MXU accumulate, bf16 store."""
    xw = jnp.dot(x_ref[...], w_ref[...], preferred_element_type=jnp.float32)
    y_ref[...] = (out_norm_ref[...] * xw).astype(y_ref.dtype)


def _graphconv_aggregate_kernel(a_ref, y_ref, in_norm_ref, b_ref, o_ref,
                                acc_ref, *, apply_relu, block_k, y_resident):
    """acc += A_tile @ Y_tile over k; epilogue: in_norm * acc + b (+ ReLU)."""
    k = pl.program_id(1)

    @pl.when(k == 0)
    def _():
        acc_ref[...] = jnp.zeros_like(acc_ref)

    a = a_ref[...].astype(jnp.bfloat16)          # int8 0/1 -> bf16 MXU feed
    if y_resident:
        c0 = pl.multiple_of(k * block_k, block_k)
        y = y_ref[pl.ds(c0, block_k), :]          # Y held fully in VMEM
    else:
        y = y_ref[...]
    acc_ref[...] += jnp.dot(a, y, preferred_element_type=jnp.float32)

    @pl.when(k == pl.num_programs(1) - 1)
    def _():
        h = acc_ref[...] * in_norm_ref[...] + b_ref[...]
        if apply_relu:
            h = jnp.maximum(h, 0.0)
        o_ref[...] = h.astype(o_ref.dtype)


# ------------------------------ pallas_call wrappers ----------------------- #

def degree_norms(a_i8, *, block_m, block_k):
    """Returns (in_norm (Np,1) f32, out_norm (1,Np) f32) in one pass over A."""
    n_p = a_i8.shape[0]
    kernel = functools.partial(_degree_norms_kernel, block_m=block_m)
    in_norm, out_norm = pl.pallas_call(
        kernel,
        out_shape=(jax.ShapeDtypeStruct((n_p, 1), jnp.float32),
                   jax.ShapeDtypeStruct((1, n_p), jnp.float32)),
        grid_spec=pltpu.PrefetchScalarGridSpec(
            num_scalar_prefetch=0,
            grid=(n_p // block_k, n_p // block_m),          # (col, row) tiles
            in_specs=[pl.BlockSpec((block_m, block_k), lambda k, i: (i, k))],
            out_specs=[pl.BlockSpec((n_p, 1), lambda k, i: (0, 0)),
                       pl.BlockSpec((1, block_k), lambda k, i: (0, k))],
            scratch_shapes=[pltpu.VMEM((1, block_k), jnp.float32),
                            pltpu.VMEM((n_p, 1), jnp.float32)],
        ),
        compiler_params=_compiler_params(("arbitrary", "arbitrary")),
    )(a_i8)
    return in_norm, out_norm


def xw_scale(x_pad, w_pad, out_norm, *, block_m):
    """Y = out_norm * (X @ W) as a row-tiled kernel; bf16 in / bf16 out."""
    # TODO(synk): for very large hidden dims the full (f_in_p, f_out_p) weight
    # block should be K-tiled; fine for typical GCN widths (<= a few thousand).
    n_p, f_in_p = x_pad.shape
    f_out_p = w_pad.shape[1]
    return pl.pallas_call(
        _xw_scale_kernel,
        out_shape=jax.ShapeDtypeStruct((n_p, f_out_p), jnp.bfloat16),
        grid_spec=pltpu.PrefetchScalarGridSpec(
            num_scalar_prefetch=0,
            grid=(n_p // block_m,),
            in_specs=[
                pl.BlockSpec((block_m, f_in_p), lambda i: (i, 0)),
                pl.BlockSpec((f_in_p, f_out_p), lambda i: (0, 0)),
                pl.BlockSpec((block_m, 1), lambda i: (i, 0)),
            ],
            out_specs=pl.BlockSpec((block_m, f_out_p), lambda i: (i, 0)),
        ),
        compiler_params=_compiler_params(("parallel",)),
    )(x_pad, w_pad, out_norm)


def graphconv_aggregate(a_i8, y, in_norm, b_pad, *, apply_relu,
                        block_m, block_k):
    """h = act(in_norm * (A @ Y) + b), tiled (row, k) with f32 accumulator."""
    n_p = a_i8.shape[0]
    f_out_p = y.shape[1]
    y_resident = (n_p * f_out_p * 2) <= _Y_RESIDENT_BYTES
    if y_resident:
        y_spec = pl.BlockSpec((n_p, f_out_p), lambda i, k: (0, 0))   # fetch once
    else:
        y_spec = pl.BlockSpec((block_k, f_out_p), lambda i, k: (k, 0))
    kernel = functools.partial(_graphconv_aggregate_kernel,
                               apply_relu=apply_relu, block_k=block_k,
                               y_resident=y_resident)
    return pl.pallas_call(
        kernel,
        out_shape=jax.ShapeDtypeStruct((n_p, f_out_p), jnp.bfloat16),
        grid_spec=pltpu.PrefetchScalarGridSpec(
            num_scalar_prefetch=0,
            grid=(n_p // block_m, n_p // block_k),
            in_specs=[
                pl.BlockSpec((block_m, block_k), lambda i, k: (i, k)),  # A int8
                y_spec,                                                 # Y bf16
                pl.BlockSpec((block_m, 1), lambda i, k: (i, 0)),        # in_norm
                pl.BlockSpec((1, f_out_p), lambda i, k: (0, 0)),        # bias
            ],
            out_specs=pl.BlockSpec((block_m, f_out_p), lambda i, k: (i, 0)),
            scratch_shapes=[pltpu.VMEM((block_m, f_out_p), jnp.float32)],
        ),
        compiler_params=_compiler_params(("parallel", "arbitrary")),
    )(a_i8, y, in_norm, b_pad)


# ------------------------------ GCN wrapper -------------------------------- #

def init_gcn_params(key, num_layers, input_dim, hidden_dim, output_dim):
    """Xavier-uniform weights, zero biases (matches DGL GraphConv init)."""
    dims = []
    if num_layers == 1:
        dims.append((input_dim, output_dim))
    else:
        dims.append((input_dim, hidden_dim))
        for _ in range(num_layers - 2):
            dims.append((hidden_dim, hidden_dim))
        dims.append((hidden_dim, output_dim))
    params = []
    for (fi, fo) in dims:
        key, sub = jax.random.split(key)
        limit = math.sqrt(6.0 / (fi + fo))
        w = jax.random.uniform(sub, (fi, fo), jnp.float32, -limit, limit)
        b = jnp.zeros((fo,), jnp.float32)
        params.append((w, b))
    return params


def gcn_forward(adj, feats, params, *, block_m=1024, block_k=1024):
    """Returns (h_list, h) matching the PyTorch module's forward.

    norm_type='none'; dropout is identity (eval mode / ratio 0.0).
    Degree norms are computed in one pass over A; A_hat is never materialized.
    A is streamed int8, activations/weights bf16, accumulation f32.
    """
    n = adj.shape[0]
    f_in = feats.shape[1]
    num_layers = len(params)

    n_p, bm, bk = _choose_tiles(n, block_m, block_k)
    f_in_p = _round_up(f_in, _LANE)

    # Zero-padded adjacency as int8 (0/1 exact); padded nodes have zero degree
    # (clamped to 1) and zero incoming columns, so they never affect real rows.
    a_i8 = jnp.pad(adj.astype(jnp.float32),
                   ((0, n_p - n), (0, n_p - n))).astype(jnp.int8)
    h_pad = jnp.pad(feats.astype(jnp.float32),
                    ((0, n_p - n), (0, f_in_p - f_in))).astype(jnp.bfloat16)

    in_norm, out_norm_row = degree_norms(a_i8, block_m=bm, block_k=bk)
    out_norm = out_norm_row.reshape(n_p, 1)   # tiny O(N) layout fix in wrapper

    h_list = []
    f_cur_p = f_in_p
    for l, (w, b) in enumerate(params):
        fi, fo = w.shape
        fo_p = _round_up(fo, _LANE)
        w_pad = jnp.pad(w, ((0, f_cur_p - fi), (0, fo_p - fo))).astype(jnp.bfloat16)
        b_pad = jnp.pad(b.reshape(1, fo), ((0, 0), (0, fo_p - fo)))
        is_last = (l == num_layers - 1)

        y = xw_scale(h_pad, w_pad, out_norm, block_m=bm)
        h_pad = graphconv_aggregate(a_i8, y, in_norm, b_pad,
                                    apply_relu=not is_last,
                                    block_m=bm, block_k=bk)
        # TODO(synk): dropout with ratio>0 in training mode would need a PRNG
        # mask (pltpu.prng_*); here dropout_ratio=0.0 / eval mode => identity.
        h_list.append(h_pad[:n, :fo].astype(jnp.float32))
        f_cur_p = fo_p

    return h_list, h_list[-1]


# --------------------------------- main ------------------------------------ #

def _reference_forward(adj, feats, params):
    """Pure-jnp f32 reference of the same DGL GraphConv semantics."""
    deg_in = jnp.maximum(jnp.sum(adj, axis=1, keepdims=True), 1.0)
    deg_out = jnp.maximum(jnp.sum(adj, axis=0, keepdims=True), 1.0)
    a_hat = jax.lax.rsqrt(deg_in) * adj * jax.lax.rsqrt(deg_out)
    h = feats
    outs = []
    for l, (w, b) in enumerate(params):
        h = a_hat @ (h @ w) + b
        if l != len(params) - 1:
            h = jnp.maximum(h, 0.0)
        outs.append(h)
    return outs, h


if __name__ == "__main__":
    num_layers = 2
    input_dim = 32
    hidden_dim = 32
    output_dim = 16
    num_nodes = 16

    key = jax.random.PRNGKey(0)
    k_adj, k_feat, k_param = jax.random.split(key, 3)

    # Random sparse-ish directed graph with self-loops, as a dense adjacency.
    adj = (jax.random.uniform(k_adj, (num_nodes, num_nodes)) < 0.25).astype(jnp.float32)
    adj = jnp.maximum(adj, jnp.eye(num_nodes, dtype=jnp.float32))

    feats = jax.random.normal(k_feat, (num_nodes, input_dim), jnp.float32)
    params = init_gcn_params(k_param, num_layers, input_dim, hidden_dim, output_dim)

    h_list, h = gcn_forward(adj, feats, params)
    h = jax.block_until_ready(h)
    for t in h_list:
        jax.block_until_ready(t)

    assert h.shape == (num_nodes, output_dim)
    assert h_list[0].shape == (num_nodes, hidden_dim)

    # Numerical sanity check vs. pure-jnp f32 reference (A, X, W, Y all stream
    # through the MXU in bf16/int8 with f32 accumulation -> small tolerance).
    ref_list, ref_h = _reference_forward(adj, feats, params)
    assert bool(jnp.allclose(h, ref_h, rtol=5e-2, atol=5e-2))
    assert bool(jnp.allclose(h_list[0], ref_list[0], rtol=5e-2, atol=5e-2))

    print("KERNEL_OK")
</pallas_src>

<mosaic_0001>
module attributes {stable_mosaic.version = 11 : i64} {
  func.func @_degree_norms_kernel(%arg0: i32, %arg1: i32, %arg2: memref<128x128xi8, #tpu.memory_space<vmem>>, %arg3: memref<128x1xf32, #tpu.memory_space<vmem>>, %arg4: memref<1x128xf32, #tpu.memory_space<vmem>>, %arg5: memref<1x128xf32, #tpu.memory_space<vmem>>, %arg6: memref<128x1xf32, #tpu.memory_space<vmem>>) attributes {dimension_semantics = [#tpu.dimension_semantics<arbitrary>, #tpu.dimension_semantics<arbitrary>], iteration_bounds = array<i64: 1, 1>, scalar_prefetch = 0 : i64, scratch_operands = 2 : i64, tpu.core_type = #tpu.core_type<tc>, window_params = [{transform_indices = @transform_0, window_bounds = array<i64: 128, 128>}, {pipeline_mode = #tpu.pipeline_mode<synchronous>, transform_indices = @transform_1, window_bounds = array<i64: 128, 1>}, {transform_indices = @transform_2, window_bounds = array<i64: 1, 128>}]} {
    %c0_i32 = arith.constant 0 : i32
    %0 = arith.cmpi eq, %arg0, %c0_i32 : i32
    %c0_i32_0 = arith.constant 0 : i32
    %1 = arith.cmpi eq, %arg1, %c0_i32_0 : i32
    %2 = arith.andi %0, %1 : i1
    %3 = arith.extui %2 : i1 to i32
    %c0_i32_1 = arith.constant 0 : i32
    %4 = arith.cmpi ne, %3, %c0_i32_1 : i32
    scf.if %4 {
      %cst_17 = arith.constant 0.000000e+00 : f32
      %32 = vector.broadcast %cst_17 : f32 to vector<128x1xf32>
      %c0_18 = arith.constant 0 : index
      %c0_19 = arith.constant 0 : index
      %33 = vector.load %arg6[%c0_18, %c0_19] : memref<128x1xf32, #tpu.memory_space<vmem>>, vector<128x1xf32>
      tpu.vector_store %arg6[%c0_18, %c0_19], %32 {strides = array<i32>} : memref<128x1xf32, #tpu.memory_space<vmem>>, vector<128x1xf32>,
    } else {
    }
    %c0_i32_2 = arith.constant 0 : i32
    %5 = arith.cmpi eq, %arg1, %c0_i32_2 : i32
    %6 = arith.extui %5 : i1 to i32
    %c0_i32_3 = arith.constant 0 : i32
    %7 = arith.cmpi ne, %6, %c0_i32_3 : i32
    scf.if %7 {
      %cst_17 = arith.constant 0.000000e+00 : f32
      %32 = vector.broadcast %cst_17 : f32 to vector<1x128xf32>
      %c0_18 = arith.constant 0 : index
      %c0_19 = arith.constant 0 : index
      %33 = vector.load %arg5[%c0_18, %c0_19] : memref<1x128xf32, #tpu.memory_space<vmem>>, vector<1x128xf32>
      tpu.vector_store %arg5[%c0_18, %c0_19], %32 {strides = array<i32>} : memref<1x128xf32, #tpu.memory_space<vmem>>, vector<1x128xf32>,
    } else {
    }
    %c0 = arith.constant 0 : index
    %c0_4 = arith.constant 0 : index
    %8 = vector.load %arg2[%c0, %c0_4] : memref<128x128xi8, #tpu.memory_space<vmem>>, vector<128x128xi8>
    %9 = arith.sitofp %8 : vector<128x128xi8> to vector<128x128xf32>
    %c0_5 = arith.constant 0 : index
    %c0_6 = arith.constant 0 : index
    %10 = vector.load %arg5[%c0_5, %c0_6] : memref<1x128xf32, #tpu.memory_space<vmem>>, vector<1x128xf32>
    %cst = arith.constant dense<0.000000e+00> : vector<128xf32>
    %11 = vector.multi_reduction <add>, %9, %cst [0] : vector<128x128xf32> to vector<128xf32>
    %12 = vector.shape_cast %11 : vector<128xf32> to vector<1x128xf32>
    %13 = arith.addf %10, %12 : vector<1x128xf32>
    %c0_7 = arith.constant 0 : index
    %c0_8 = arith.constant 0 : index
    %14 = vector.load %arg5[%c0_7, %c0_8] : memref<1x128xf32, #tpu.memory_space<vmem>>, vector<1x128xf32>
    tpu.vector_store %arg5[%c0_7, %c0_8], %13 {strides = array<i32>} : memref<1x128xf32, #tpu.memory_space<vmem>>, vector<1x128xf32>,
    %c128_i32 = arith.constant 128 : i32
    %15 = arith.muli %arg1, %c128_i32 : i32
    %16 = tpu.assume_multiple %15, 128 : i32
    %17 = arith.index_cast %16 : i32 to index
    %c0_9 = arith.constant 0 : index
    %18 = vector.load %arg6[%17, %c0_9] : memref<128x1xf32, #tpu.memory_space<vmem>>, vector<128x1xf32>
    %cst_10 = arith.constant dense<0.000000e+00> : vector<128xf32>
    %19 = vector.multi_reduction <add>, %9, %cst_10 [1] : vector<128x128xf32> to vector<128xf32>
    %20 = vector.shape_cast %19 : vector<128xf32> to vector<128x1xf32>
    %21 = arith.addf %18, %20 : vector<128x1xf32>
    %22 = arith.index_cast %16 : i32 to index
    %c0_11 = arith.constant 0 : index
    %23 = vector.load %arg6[%22, %c0_11] : memref<128x1xf32, #tpu.memory_space<vmem>>, vector<128x1xf32>
    tpu.vector_store %arg6[%22, %c0_11], %21 {strides = array<i32>} : memref<128x1xf32, #tpu.memory_space<vmem>>, vector<128x1xf32>,
    %c0_i32_12 = arith.constant 0 : i32
    %24 = arith.cmpi eq, %arg1, %c0_i32_12 : i32
    %25 = arith.extui %24 : i1 to i32
    %c0_i32_13 = arith.constant 0 : i32
    %26 = arith.cmpi ne, %25, %c0_i32_13 : i32
    scf.if %26 {
      %c0_17 = arith.constant 0 : index
      %c0_18 = arith.constant 0 : index
      %32 = vector.load %arg5[%c0_17, %c0_18] : memref<1x128xf32, #tpu.memory_space<vmem>>, vector<1x128xf32>
      %cst_19 = arith.constant 1.000000e+00 : f32
      %33 = vector.broadcast %cst_19 : f32 to vector<1x128xf32>
      %34 = arith.maximumf %32, %33 : vector<1x128xf32>
      %35 = math.rsqrt %34 : vector<1x128xf32>
      %c0_20 = arith.constant 0 : index
      %c0_21 = arith.constant 0 : index
      %36 = vector.load %arg4[%c0_20, %c0_21] : memref<1x128xf32, #tpu.memory_space<vmem>>, vector<1x128xf32>
      tpu.vector_store %arg4[%c0_20, %c0_21], %35 {strides = array<i32>} : memref<1x128xf32, #tpu.memory_space<vmem>>, vector<1x128xf32>,
    } else {
    }
    %c0_i32_14 = arith.constant 0 : i32
    %27 = arith.cmpi eq, %arg0, %c0_i32_14 : i32
    %c0_i32_15 = arith.constant 0 : i32
    %28 = arith.cmpi eq, %arg1, %c0_i32_15 : i32
    %29 = arith.andi %27, %28 : i1
    %30 = arith.extui %29 : i1 to i32
    %c0_i32_16 = arith.constant 0 : i32
    %31 = arith.cmpi ne, %30, %c0_i32_16 : i32
    scf.if %31 {
      %c0_17 = arith.constant 0 : index
      %c0_18 = arith.constant 0 : index
      %32 = vector.load %arg6[%c0_17, %c0_18] : memref<128x1xf32, #tpu.memory_space<vmem>>, vector<128x1xf32>
      %cst_19 = arith.constant 1.000000e+00 : f32
      %33 = vector.broadcast %cst_19 : f32 to vector<128x1xf32>
      %34 = arith.maximumf %32, %33 : vector<128x1xf32>
      %35 = math.rsqrt %34 : vector<128x1xf32>
      %c0_20 = arith.constant 0 : index
      %c0_21 = arith.constant 0 : index
      %36 = vector.load %arg3[%c0_20, %c0_21] : memref<128x1xf32, #tpu.memory_space<vmem>>, vector<128x1xf32>
      tpu.vector_store %arg3[%c0_20, %c0_21], %35 {strides = array<i32>} : memref<128x1xf32, #tpu.memory_space<vmem>>, vector<128x1xf32>,
    } else {
    }
    return
  }
  func.func @transform_0(%arg0: i32, %arg1: i32) -> (i32, i32) {
    %c0_i32 = arith.constant 0 : i32
    return %arg1, %arg0 : i32, i32
  }
  func.func @transform_1(%arg0: i32, %arg1: i32) -> (i32, i32) {
    %c0_i32 = arith.constant 0 : i32
    %c0_i32_0 = arith.constant 0 : i32
    %c0_i32_1 = arith.constant 0 : i32
    return %c0_i32, %c0_i32_0 : i32, i32
  }
  func.func @transform_2(%arg0: i32, %arg1: i32) -> (i32, i32) {
    %c0_i32 = arith.constant 0 : i32
    %c0_i32_0 = arith.constant 0 : i32
    return %c0_i32, %arg0 : i32, i32
  }
}

</mosaic_0001>

<llo_original>
// kernel: tpu_custom_call.1
$region0: #{tpu_custom_call.1}
  #allocation0 [shape = 'u32[]', space=smem, size = 0x4, offset = 0x4, fixed_abs, tag = 'smem constant byte address 0x4 - core index']
  #allocation1 [shape = 'u32[144,128]{1,0:T(1,128)}', space=vmem, size = 0x12000, scoped, tag = 'internal scratch']
  #allocation2 [shape = 'f32[1,128]{1,0:T(1,128)}', space=vmem, size = 0x200, scoped, tag = 'scratch operand']
  #allocation3 [shape = 'f32[128,1]{1,0:T(8,128)}', space=vmem, size = 0x10000, scoped, tag = 'scratch operand']
  %s0 = inlined_call_operand.hbm [shape: s8[128,128], index: 0, kind: input, shape index: {}]
  %s1 = inlined_call_operand.vmem [shape: f32[128,1], index: 1, kind: output, shape index: {0}]
  %s2 = inlined_call_operand.hbm [shape: f32[1,128], index: 2, kind: output, shape index: {1}]
  %3 = xla_tuple %s1, %s2
  %s4 = sld [smem:[#allocation0]]
  $region42: #{tpu_custom_call.1} parent=0
    _
  %s6 = ssub.s32 1, %s4
  %s7 = scalar_select 0, %s6, %s4
  $region1: #{tpu_custom_call.1} parent=0
    #allocation4 [shape = 'u8[16384]{0}', space=vmem, size = 0x4000, scoped, tag = 'input window, operand 0, single buffered']
    #allocation5 [shape = 's32[1]{0}', space=sflag, size = 0x4, scoped, tag = 'scoped memory for tpu_custom_call.1']
    #allocation6 [shape = 's32[1]{0}', space=sflag, size = 0x4, scoped, tag = 'scoped memory for tpu_custom_call.1']
    #allocation7 [shape = 'u8[512]{0}', space=vmem, size = 0x400, scoped, tag = 'output window, operand 1, single buffered']
    %8 = vsyncpa [#allocation5], 0
    %9 = vsyncpa [#allocation6], 0
    // Predicated region
    $region2: #{tpu_custom_call.1} parent=1 // pred_check
      _
    $region3: #{tpu_custom_call.1} parent=1 // pred_check_branch
      %11 = sbr.rel (0) target = $region5
    $region4: #{tpu_custom_call.1} parent=1 // pred_region
      %s13 = ssub.s32 512, 512
      %14 = vsyncadd [#allocation5], %s13
      %s15 = sshll.u32 [#allocation4], 4
      %s16 = int_to_ptr.vmem [resolvable:$true] %s15
      %21 = dma.hbm_to_vmem [thread:$0]  %s0, 512, %s16, [#allocation5], 128, 128, 8
    $region5: #{tpu_custom_call.1} parent=1 // pred_fallthru
      _
    // Predicated region
    $region6: #{tpu_custom_call.1} parent=1 // pred_check
      _
    $region7: #{tpu_custom_call.1} parent=1 // pred_check_branch
      %23 = sbr.rel (0) target = $region9
    $region8: #{tpu_custom_call.1} parent=1 // pred_region
      %24 = dma.done [#allocation5], 512
    $region9: #{tpu_custom_call.1} parent=1 // pred_fallthru
      _
    %p25 = scmp.eq.s32.totalorder 0, 0
    %p26 = scmp.eq.s32.totalorder 0, 0
    %p27 = pnand %p25, %p26
    %p28 = pneg %p27
    // Predicated region
    $region10: #{tpu_custom_call.1} parent=1 // pred_check
      _
    $region11: #{tpu_custom_call.1} parent=1 // pred_check_branch
      %30 = sbr.rel (%p27) target = $region13
    $region12: #{tpu_custom_call.1} parent=1 // pred_region
      %vm31 = vcmask 7168
      %32 = vst.msk [vmem:[#allocation3] sm:$0xff] %vm31, 0.0
      %33 = vst.msk [vmem:[#allocation3 + $0x8] sm:$0xff] %vm31, 0.0
      %34 = vst.msk [vmem:[#allocation3 + $0x10] sm:$0xff] %vm31, 0.0
      %35 = vst.msk [vmem:[#allocation3 + $0x18] sm:$0xff] %vm31, 0.0
      %36 = vst.msk [vmem:[#allocation3 + $0x20] sm:$0xff] %vm31, 0.0
      %37 = vst.msk [vmem:[#allocation3 + $0x28] sm:$0xff] %vm31, 0.0
      %38 = vst.msk [vmem:[#allocation3 + $0x30] sm:$0xff] %vm31, 0.0
      %39 = vst.msk [vmem:[#allocation3 + $0x38] sm:$0xff] %vm31, 0.0
      %40 = vst.msk [vmem:[#allocation3 + $0x40] sm:$0xff] %vm31, 0.0
      %41 = vst.msk [vmem:[#allocation3 + $0x48] sm:$0xff] %vm31, 0.0
      %42 = vst.msk [vmem:[#allocation3 + $0x50] sm:$0xff] %vm31, 0.0
      %43 = vst.msk [vmem:[#allocation3 + $0x58] sm:$0xff] %vm31, 0.0
      %44 = vst.msk [vmem:[#allocation3 + $0x60] sm:$0xff] %vm31, 0.0
      %45 = vst.msk [vmem:[#allocation3 + $0x68] sm:$0xff] %vm31, 0.0
      %46 = vst.msk [vmem:[#allocation3 + $0x70] sm:$0xff] %vm31, 0.0
      %47 = vst.msk [vmem:[#allocation3 + $0x78] sm:$0xff] %vm31, 0.0
    $region13: #{tpu_custom_call.1} parent=1 // pred_fallthru
      _
    // Predicated region
    $region14: #{tpu_custom_call.1} parent=1 // pred_check
      %p48 = pneg %p26
    $region15: #{tpu_custom_call.1} parent=1 // pred_check_branch
      %50 = sbr.rel (%p48) target = $region17
    $region16: #{tpu_custom_call.1} parent=1 // pred_region
      %51 = vst [vmem:[#allocation2] sm:$0x1] 0.0
    $region17: #{tpu_custom_call.1} parent=1 // pred_fallthru
      _
    %v52 = vld [vmem:[#allocation4] sm:$0xff]
    %v53 = vld [vmem:[#allocation4 + $0x8] sm:$0xff]
    %v54 = vld [vmem:[#allocation4 + $0x10] sm:$0xff]
    %v55 = vld [vmem:[#allocation4 + $0x18] sm:$0xff]
    %v56 = vunpack.c.0.s8 %v52
    %v57 = vunpack.c.1.s8 %v52
    %v58 = vunpack.c.2.s8 %v52
    %v59 = vunpack.c.3.s8 %v52
    %v60 = vunpack.c.0.s8 %v53
    %v61 = vunpack.c.1.s8 %v53
    %v62 = vunpack.c.2.s8 %v53
    %v63 = vunpack.c.3.s8 %v53
    %v64 = vunpack.c.0.s8 %v54
    %v65 = vunpack.c.1.s8 %v54
    %v66 = vunpack.c.2.s8 %v54
    %v67 = vunpack.c.3.s8 %v54
    %v68 = vunpack.c.0.s8 %v55
    %v69 = vunpack.c.1.s8 %v55
    %v70 = vunpack.c.2.s8 %v55
    %v71 = vunpack.c.3.s8 %v55
    %v72 = vcvt.s32.f32 %v56
    %v73 = vcvt.s32.f32 %v57
    %v74 = vcvt.s32.f32 %v58
    %v75 = vcvt.s32.f32 %v59
    %v76 = vcvt.s32.f32 %v60
    %v77 = vcvt.s32.f32 %v61
    %v78 = vcvt.s32.f32 %v62
    %v79 = vcvt.s32.f32 %v63
    %v80 = vcvt.s32.f32 %v64
    %v81 = vcvt.s32.f32 %v65
    %v82 = vcvt.s32.f32 %v66
    %v83 = vcvt.s32.f32 %v67
    %v84 = vcvt.s32.f32 %v68
    %v85 = vcvt.s32.f32 %v69
    %v86 = vcvt.s32.f32 %v70
    %v87 = vcvt.s32.f32 %v71
    %v88 = vld [vmem:[#allocation2] sm:$0x1]
    %v89 = vadd.f32 %v72, %v73
    %v90 = vadd.f32 %v89, %v74
    %v91 = vadd.f32 %v90, %v75
    %v92 = vadd.f32 %v91, %v76
    %v93 = vadd.f32 %v92, %v77
    %v94 = vadd.f32 %v93, %v78
    %v95 = vadd.f32 %v94, %v79
    %v96 = vadd.f32 %v95, %v80
    %v97 = vadd.f32 %v96, %v81
    %v98 = vadd.f32 %v97, %v82
    %v99 = vadd.f32 %v98, %v83
    %v100 = vadd.f32 %v99, %v84
    %v101 = vadd.f32 %v100, %v85
    %v102 = vadd.f32 %v101, %v86
    %v103 = vadd.f32 %v102, %v87
    %v104 = vrot.slane %v103, 4
    %v105 = vadd.f32 %v103, %v104
    %v106 = vrot.slane %v105, 2
    %v107 = vadd.f32 %v105, %v106
    %v108 = vrot.slane %v107, 1
    %v109 = vadd.f32 %v107, %v108
    %v110 = vadd.f32 %v88, %v109
    %111 = vst [vmem:[#allocation2] sm:$0x1] %v110
    %s112 = smul.u32 0, 128
    %s113 = scalar_lea.vmem [#allocation3], %s112
    %v114 = vld [vmem:[%s113] sm:$0xff]
    %v115 = vld [vmem:[%s113 + $0x8] sm:$0xff]
    %v116 = vld [vmem:[%s113 + $0x10] sm:$0xff]
    %v117 = vld [vmem:[%s113 + $0x18] sm:$0xff]
    %v118 = vld [vmem:[%s113 + $0x20] sm:$0xff]
    %v119 = vld [vmem:[%s113 + $0x28] sm:$0xff]
    %v120 = vld [vmem:[%s113 + $0x30] sm:$0xff]
    %v121 = vld [vmem:[%s113 + $0x38] sm:$0xff]
    %v122 = vld [vmem:[%s113 + $0x40] sm:$0xff]
    %v123 = vld [vmem:[%s113 + $0x48] sm:$0xff]
    %v124 = vld [vmem:[%s113 + $0x50] sm:$0xff]
    %v125 = vld [vmem:[%s113 + $0x58] sm:$0xff]
    %v126 = vld [vmem:[%s113 + $0x60] sm:$0xff]
    %v127 = vld [vmem:[%s113 + $0x68] sm:$0xff]
    %v128 = vld [vmem:[%s113 + $0x70] sm:$0xff]
    %v129 = vld [vmem:[%s113 + $0x78] sm:$0xff]
    %130 = vadd.xlane.f32.xlu0 %v72
    %v131 = vpop.xlane.xlu0 %130
    %132 = vadd.xlane.f32.xlu0 %v73
    %v133 = vpop.xlane.xlu0 %132
    %134 = vadd.xlane.f32.xlu0 %v74
    %v135 = vpop.xlane.xlu0 %134
    %136 = vadd.xlane.f32.xlu0 %v75
    %v137 = vpop.xlane.xlu0 %136
    %138 = vadd.xlane.f32.xlu0 %v76
    %v139 = vpop.xlane.xlu0 %138
    %140 = vadd.xlane.f32.xlu0 %v77
    %v141 = vpop.xlane.xlu0 %140
    %142 = vadd.xlane.f32.xlu0 %v78
    %v143 = vpop.xlane.xlu0 %142
    %144 = vadd.xlane.f32.xlu0 %v79
    %v145 = vpop.xlane.xlu0 %144
    %146 = vadd.xlane.f32.xlu0 %v80
    %v147 = vpop.xlane.xlu0 %146
    %148 = vadd.xlane.f32.xlu0 %v81
    %v149 = vpop.xlane.xlu0 %148
    %150 = vadd.xlane.f32.xlu0 %v82
    %v151 = vpop.xlane.xlu0 %150
    %152 = vadd.xlane.f32.xlu0 %v83
    %v153 = vpop.xlane.xlu0 %152
    %154 = vadd.xlane.f32.xlu0 %v84
    %v155 = vpop.xlane.xlu0 %154
    %156 = vadd.xlane.f32.xlu0 %v85
    %v157 = vpop.xlane.xlu0 %156
    %158 = vadd.xlane.f32.xlu0 %v86
    %v159 = vpop.xlane.xlu0 %158
    %160 = vadd.xlane.f32.xlu0 %v87
    %v161 = vpop.xlane.xlu0 %160
    %v162 = vadd.f32 %v114, %v131
    %v163 = vadd.f32 %v115, %v133
    %v164 = vadd.f32 %v116, %v135
    %v165 = vadd.f32 %v117, %v137
    %v166 = vadd.f32 %v118, %v139
    %v167 = vadd.f32 %v119, %v141
    %v168 = vadd.f32 %v120, %v143
    %v169 = vadd.f32 %v121, %v145
    %v170 = vadd.f32 %v122, %v147
    %v171 = vadd.f32 %v123, %v149
    %v172 = vadd.f32 %v124, %v151
    %v173 = vadd.f32 %v125, %v153
    %v174 = vadd.f32 %v126, %v155
    %v175 = vadd.f32 %v127, %v157
    %v176 = vadd.f32 %v128, %v159
    %v177 = vadd.f32 %v129, %v161
    %vm178 = vcmask 7168
    %179 = vst.msk [vmem:[%s113] sm:$0xff] %vm178, %v162
    %180 = vst.msk [vmem:[%s113 + $0x8] sm:$0xff] %vm178, %v163
    %181 = vst.msk [vmem:[%s113 + $0x10] sm:$0xff] %vm178, %v164
    %182 = vst.msk [vmem:[%s113 + $0x18] sm:$0xff] %vm178, %v165
    %183 = vst.msk [vmem:[%s113 + $0x20] sm:$0xff] %vm178, %v166
    %184 = vst.msk [vmem:[%s113 + $0x28] sm:$0xff] %vm178, %v167
    %185 = vst.msk [vmem:[%s113 + $0x30] sm:$0xff] %vm178, %v168
    %186 = vst.msk [vmem:[%s113 + $0x38] sm:$0xff] %vm178, %v169
    %187 = vst.msk [vmem:[%s113 + $0x40] sm:$0xff] %vm178, %v170
    %188 = vst.msk [vmem:[%s113 + $0x48] sm:$0xff] %vm178, %v171
    %189 = vst.msk [vmem:[%s113 + $0x50] sm:$0xff] %vm178, %v172
    %190 = vst.msk [vmem:[%s113 + $0x58] sm:$0xff] %vm178, %v173
    %191 = vst.msk [vmem:[%s113 + $0x60] sm:$0xff] %vm178, %v174
    %192 = vst.msk [vmem:[%s113 + $0x68] sm:$0xff] %vm178, %v175
    %193 = vst.msk [vmem:[%s113 + $0x70] sm:$0xff] %vm178, %v176
    %194 = vst.msk [vmem:[%s113 + $0x78] sm:$0xff] %vm178, %v177
    // Predicated region
    $region18: #{tpu_custom_call.1} parent=1 // pred_check
      %p195 = pneg %p26
    $region19: #{tpu_custom_call.1} parent=1 // pred_check_branch
      %197 = sbr.rel (%p195) target = $region21
    $region20: #{tpu_custom_call.1} parent=1 // pred_region
      %v198 = vld [vmem:[#allocation2] sm:$0x1]
      %v199 = vmax.f32 %v198, 1.0
      %v200 = vrsqrt.pop %v199
      %201 = vst [vmem:[#allocation7] sm:$0x1] %v200
    $region21: #{tpu_custom_call.1} parent=1 // pred_fallthru
      _
    // Predicated region
    $region22: #{tpu_custom_call.1} parent=1 // pred_check
      _
    $region23: #{tpu_custom_call.1} parent=1 // pred_check_branch
      %203 = sbr.rel (%p27) target = $region25
    $region24: #{tpu_custom_call.1} parent=1 // pred_region
      %v204 = vld [vmem:[#allocation3] sm:$0xff]
      %v205 = vld [vmem:[#allocation3 + $0x8] sm:$0xff]
      %v206 = vld [vmem:[#allocation3 + $0x10] sm:$0xff]
      %v207 = vld [vmem:[#allocation3 + $0x18] sm:$0xff]
      %v208 = vld [vmem:[#allocation3 + $0x20] sm:$0xff]
      %v209 = vld [vmem:[#allocation3 + $0x28] sm:$0xff]
      %v210 = vld [vmem:[#allocation3 + $0x30] sm:$0xff]
      %v211 = vld [vmem:[#allocation3 + $0x38] sm:$0xff]
      %v212 = vld [vmem:[#allocation3 + $0x40] sm:$0xff]
      %v213 = vld [vmem:[#allocation3 + $0x48] sm:$0xff]
      %v214 = vld [vmem:[#allocation3 + $0x50] sm:$0xff]
      %v215 = vld [vmem:[#allocation3 + $0x58] sm:$0xff]
      %v216 = vld [vmem:[#allocation3 + $0x60] sm:$0xff]
      %v217 = vld [vmem:[#allocation3 + $0x68] sm:$0xff]
      %v218 = vld [vmem:[#allocation3 + $0x70] sm:$0xff]
      %v219 = vld [vmem:[#allocation3 + $0x78] sm:$0xff]
      %v220 = vmax.f32 %v204, 1.0
      %v221 = vmax.f32 %v205, 1.0
      %v222 = vmax.f32 %v206, 1.0
      %v223 = vmax.f32 %v207, 1.0
      %v224 = vmax.f32 %v208, 1.0
      %v225 = vmax.f32 %v209, 1.0
      %v226 = vmax.f32 %v210, 1.0
      %v227 = vmax.f32 %v211, 1.0
      %v228 = vmax.f32 %v212, 1.0
      %v229 = vmax.f32 %v213, 1.0
      %v230 = vmax.f32 %v214, 1.0
      %v231 = vmax.f32 %v215, 1.0
      %v232 = vmax.f32 %v216, 1.0
      %v233 = vmax.f32 %v217, 1.0
      %v234 = vmax.f32 %v218, 1.0
      %v235 = vmax.f32 %v219, 1.0
      %v236 = vrsqrt.pop %v220
      %v237 = vrsqrt.pop %v221
      %v238 = vrsqrt.pop %v222
      %v239 = vrsqrt.pop %v223
      %v240 = vrsqrt.pop %v224
      %v241 = vrsqrt.pop %v225
      %v242 = vrsqrt.pop %v226
      %v243 = vrsqrt.pop %v227
      %v244 = vrsqrt.pop %v228
      %v245 = vrsqrt.pop %v229
      %v246 = vrsqrt.pop %v230
      %v247 = vrsqrt.pop %v231
      %v248 = vrsqrt.pop %v232
      %v249 = vrsqrt.pop %v233
      %v250 = vrsqrt.pop %v234
      %v251 = vrsqrt.pop %v235
      %252 = vst.msk [vmem:[%s1] sm:$0xff] %vm178, %v236
      %253 = vst.msk [vmem:[%s1 + $0x8] sm:$0xff] %vm178, %v237
      %254 = vst.msk [vmem:[%s1 + $0x10] sm:$0xff] %vm178, %v238
      %255 = vst.msk [vmem:[%s1 + $0x18] sm:$0xff] %vm178, %v239
      %256 = vst.msk [vmem:[%s1 + $0x20] sm:$0xff] %vm178, %v240
      %257 = vst.msk [vmem:[%s1 + $0x28] sm:$0xff] %vm178, %v241
      %258 = vst.msk [vmem:[%s1 + $0x30] sm:$0xff] %vm178, %v242
      %259 = vst.msk [vmem:[%s1 + $0x38] sm:$0xff] %vm178, %v243
      %260 = vst.msk [vmem:[%s1 + $0x40] sm:$0xff] %vm178, %v244
      %261 = vst.msk [vmem:[%s1 + $0x48] sm:$0xff] %vm178, %v245
      %262 = vst.msk [vmem:[%s1 + $0x50] sm:$0xff] %vm178, %v246
      %263 = vst.msk [vmem:[%s1 + $0x58] sm:$0xff] %vm178, %v247
      %264 = vst.msk [vmem:[%s1 + $0x60] sm:$0xff] %vm178, %v248
      %265 = vst.msk [vmem:[%s1 + $0x68] sm:$0xff] %vm178, %v249
      %266 = vst.msk [vmem:[%s1 + $0x70] sm:$0xff] %vm178, %v250
      %267 = vst.msk [vmem:[%s1 + $0x78] sm:$0xff] %vm178, %v251
    $region25: #{tpu_custom_call.1} parent=1 // pred_fallthru
      _
    // Predicated region
    $region26: #{tpu_custom_call.1} parent=1 // pred_check
      _
    $region27: #{tpu_custom_call.1} parent=1 // pred_check_branch
      %269 = sbr.rel (0) target = $region29
    $region28: #{tpu_custom_call.1} parent=1 // pred_region
      _
    $region29: #{tpu_custom_call.1} parent=1 // pred_fallthru
      _
    // Predicated region
    $region30: #{tpu_custom_call.1} parent=1 // pred_check
      _
    $region31: #{tpu_custom_call.1} parent=1 // pred_check_branch
      %271 = sbr.rel (0) target = $region33
    $region32: #{tpu_custom_call.1} parent=1 // pred_region
      %s273 = ssub.s32 16, 16
      %274 = vsyncadd [#allocation6], %s273
      %s276 = sshll.u32 [#allocation7], 4
      %s277 = int_to_ptr.vmem [resolvable:$true] %s276
      %279 = dma.vmem_to_hbm [thread:$0]  %s277, 16, %s2, [#allocation6]
    $region33: #{tpu_custom_call.1} parent=1 // pred_fallthru
      _
    // Predicated region
    $region34: #{tpu_custom_call.1} parent=1 // pred_check
      _
    $region35: #{tpu_custom_call.1} parent=1 // pred_check_branch
      %281 = sbr.rel (0) target = $region37
    $region36: #{tpu_custom_call.1} parent=1 // pred_region
      _
    $region37: #{tpu_custom_call.1} parent=1 // pred_fallthru
      _
    // Predicated region
    $region38: #{tpu_custom_call.1} parent=1 // pred_check
      _
    $region39: #{tpu_custom_call.1} parent=1 // pred_check_branch
      %283 = sbr.rel (0) target = $region41
    $region40: #{tpu_custom_call.1} parent=1 // pred_region
      %284 = dma.done [#allocation6], 16
    $region41: #{tpu_custom_call.1} parent=1 // pred_fallthru
      _
    %285 = vsyncpa [#allocation5], 1
    %286 = vsyncpa [#allocation6], 1

</llo_original>
